<compile_context>
chip_gen: v7x
topology: tpu7x:2x2x1
jax: 0.10.0
libtpu: 0.0.40
codegen_flags: <defaults>
</compile_context>

<pallas_src>
import functools
import math

import jax
import jax.numpy as jnp
from jax.experimental import pallas as pl
from jax.experimental.pallas import tpu as pltpu


def _round_up(x, m):
    return ((x + m - 1) // m) * m


def _vmem_limit_bytes():
    """Generation-aware scoped-VMEM limit, leaving headroom for Mosaic scratch."""
    try:
        cap = int(pltpu.get_tpu_info().vmem_capacity_bytes)
    except Exception:
        cap = 64 * 1024 * 1024  # conservative fallback (v7x physical size)
    # ~48 MiB on v7x (64 MiB phys), ~96 MiB on v5e/v6e (128 MiB phys).
    return int(min(cap * 3 // 4, 100 * 1024 * 1024))


def _resident_spec(shape):
    """Full-array block, same for every grid step, single-buffered."""
    try:
        return pl.BlockSpec(shape, lambda i: (0, 0), pipeline_mode=pl.Buffered(1))
    except (TypeError, AttributeError, ValueError):
        # Older Pallas without pipeline_mode: fall back to default buffering.
        return pl.BlockSpec(shape, lambda i: (0, 0))


def _pick_tm(M, in_dim, out_dim, max_width, resident_bytes, vmem_limit):
    """Largest row tile that fits the VMEM budget, then capped so the grid has
    at least 2 steps (keeps both v7x TensorCores busy)."""
    budget = int(vmem_limit * 0.7) - resident_bytes

    def step_bytes(tm):
        io = 2 * tm * in_dim * 4 + 2 * tm * out_dim * 4   # double-buffered x / out
        inter = 4 * tm * max_width * 4                     # in-kernel temporaries
        return io + inter

    tm = 8
    for cand in (1024, 512, 256, 128, 64, 32, 16, 8):
        if step_bytes(cand) <= budget:
            tm = cand
            break
    if M > 8:
        tm = min(tm, _round_up(-(-M // 2), 8))   # grid >= 2 when possible (v7x)
    tm = min(tm, _round_up(M, 8))                # no pointlessly oversized tile
    return max(tm, 8)


def _fused_mlp_kernel(*refs, num_layers, compute_dtype):
    # refs = (x_ref, w1, b1, w2, b2, ..., wn, bn, o_ref)
    # x_ref: (TM, in_dim); w_i: (in_i, out_i) in compute_dtype; b_i: (1, out_i) f32.
    x_ref, o_ref = refs[0], refs[-1]
    p_refs = refs[1:-1]

    h = x_ref[...].astype(jnp.float32)
    for i in range(num_layers):
        w = p_refs[2 * i][...]
        b = p_refs[2 * i + 1][...]
        h = jnp.dot(h.astype(compute_dtype), w,
                    preferred_element_type=jnp.float32)
        h = h + b                          # bias add + ReLU stay in f32
        if i < num_layers - 1:
            h = jnp.maximum(h, 0.0)
    o_ref[...] = h.astype(o_ref.dtype)


def _fused_mlp_pallas(x2d, kernel_params, out_dim, compute_dtype):
    """x2d: (M, in_dim).  kernel_params: [(W (in,out) compute_dtype, b (1,out) f32)]."""
    M, in_dim = x2d.shape
    num_layers = len(kernel_params)

    resident_bytes = 0
    max_width = max(in_dim, out_dim)
    for w, b in kernel_params:
        resident_bytes += w.size * w.dtype.itemsize + b.size * b.dtype.itemsize
        max_width = max(max_width, w.shape[1])
    # TODO(synk): if a single layer's weights ever exceed the VMEM budget
    # (hidden_dim >> 4096 in f32 on v7x), split that layer over an N/K grid axis.

    vmem_limit = _vmem_limit_bytes()
    tm = _pick_tm(M, in_dim, out_dim, max_width, resident_bytes, vmem_limit)
    grid = (pl.cdiv(M, tm),)

    in_specs = [pl.BlockSpec((tm, in_dim), lambda i: (i, 0))]
    flat_params = []
    flops = 0
    bytes_accessed = (M * in_dim + M * out_dim) * x2d.dtype.itemsize
    for w, b in kernel_params:
        in_specs.append(_resident_spec(w.shape))
        in_specs.append(_resident_spec(b.shape))
        flat_params += [w, b]
        flops += 2 * M * w.shape[0] * w.shape[1]
        bytes_accessed += w.size * w.dtype.itemsize + b.size * b.dtype.itemsize

    kernel = functools.partial(
        _fused_mlp_kernel, num_layers=num_layers, compute_dtype=compute_dtype)

    return pl.pallas_call(
        kernel,
        out_shape=jax.ShapeDtypeStruct((M, out_dim), x2d.dtype),
        grid=grid,
        in_specs=in_specs,
        out_specs=pl.BlockSpec((tm, out_dim), lambda i: (i, 0)),
        compiler_params=pltpu.CompilerParams(
            dimension_semantics=("parallel",),
            vmem_limit_bytes=vmem_limit,
        ),
        cost_estimate=pl.CostEstimate(
            flops=flops, transcendentals=0, bytes_accessed=bytes_accessed),
    )(x2d, *flat_params)


class MLP:
    """JAX/Pallas equivalent of the PyTorch MLP module (DETR FFN head)."""

    def __init__(self, input_dim, hidden_dim, output_dim, num_layers, key,
                 compute_dtype=jnp.bfloat16):
        self.num_layers = num_layers
        self.output_dim = output_dim
        self.compute_dtype = compute_dtype
        h = [hidden_dim] * (num_layers - 1)
        dims_in = [input_dim] + h
        dims_out = h + [output_dim]
        self.params = []         # PyTorch layout: W (out, in) f32, b (out,) f32
        self.kernel_params = []  # kernel layout: W^T (in, out) compute_dtype, b (1, out) f32
        for n, k in zip(dims_in, dims_out):
            key, wkey, bkey = jax.random.split(key, 3)
            # PyTorch nn.Linear default init: U(-1/sqrt(n), 1/sqrt(n))
            bound = 1.0 / math.sqrt(n)
            w = jax.random.uniform(wkey, (k, n), jnp.float32, -bound, bound)
            b = jax.random.uniform(bkey, (k,), jnp.float32, -bound, bound)
            self.params.append((w, b))
            # Pre-transpose + dtype-cast once at construction; nothing is
            # transposed, padded, or cast on the forward path in the wrapper.
            self.kernel_params.append(
                (w.T.astype(compute_dtype), b.reshape(1, k).astype(jnp.float32)))

    def __call__(self, x):
        lead_shape = x.shape[:-1]
        x2d = x.reshape(-1, x.shape[-1])
        y2d = _fused_mlp_pallas(x2d, self.kernel_params, self.output_dim,
                                self.compute_dtype)
        return y2d.reshape(*lead_shape, self.output_dim)


def _reference_forward(params, num_layers, x):
    # Pure-JAX reference (f32), matches the PyTorch forward.
    lead_shape = x.shape[:-1]
    y = x.reshape(-1, x.shape[-1])
    for i, (w, b) in enumerate(params):
        y = y @ w.T + b
        if i < num_layers - 1:
            y = jnp.maximum(y, 0.0)
    return y.reshape(*lead_shape, -1)


if __name__ == "__main__":
    key = jax.random.PRNGKey(0)
    key, xkey, pkey = jax.random.split(key, 3)

    batch, seq = 2, 8
    input_dim, hidden_dim, output_dim, num_layers = 32, 32, 4, 3

    x = jax.random.normal(xkey, (batch, seq, input_dim), jnp.float32)

    # Same params in both instances (same pkey); only the matmul dtype differs.
    mlp_f32 = MLP(input_dim, hidden_dim, output_dim, num_layers, pkey,
                  compute_dtype=jnp.float32)
    mlp_bf16 = MLP(input_dim, hidden_dim, output_dim, num_layers, pkey,
                   compute_dtype=jnp.bfloat16)

    ref = jax.block_until_ready(
        _reference_forward(mlp_f32.params, num_layers, x))

    out_f32 = jax.block_until_ready(mlp_f32(x))
    assert out_f32.shape == (batch, seq, output_dim), out_f32.shape
    assert jnp.allclose(out_f32, ref, atol=1e-4, rtol=1e-4), (
        float(jnp.max(jnp.abs(out_f32 - ref))))

    out_bf16 = jax.block_until_ready(mlp_bf16(x))
    assert out_bf16.shape == (batch, seq, output_dim), out_bf16.shape
    assert jnp.allclose(out_bf16, ref, atol=6e-2, rtol=6e-2), (
        float(jnp.max(jnp.abs(out_bf16 - ref))))

    print("KERNEL_OK")
</pallas_src>

<mosaic_0001>
module attributes {stable_mosaic.version = 11 : i64} {
  func.func @_fused_mlp_kernel(%arg0: i32, %arg1: memref<8x32xf32, #tpu.memory_space<vmem>>, %arg2: memref<32x32xf32, #tpu.memory_space<vmem>>, %arg3: memref<1x32xf32, #tpu.memory_space<vmem>>, %arg4: memref<32x32xf32, #tpu.memory_space<vmem>>, %arg5: memref<1x32xf32, #tpu.memory_space<vmem>>, %arg6: memref<32x4xf32, #tpu.memory_space<vmem>>, %arg7: memref<1x4xf32, #tpu.memory_space<vmem>>, %arg8: memref<8x4xf32, #tpu.memory_space<vmem>>) attributes {dimension_semantics = [#tpu.dimension_semantics<parallel>], iteration_bounds = array<i64: 2>, scalar_prefetch = 0 : i64, scratch_operands = 0 : i64, tpu.core_type = #tpu.core_type<tc>, window_params = [{transform_indices = @transform_0, window_bounds = array<i64: 8, 32>}, {pipeline_mode = #tpu.pipeline_mode<synchronous>, transform_indices = @transform_1, window_bounds = array<i64: 32, 32>}, {pipeline_mode = #tpu.pipeline_mode<synchronous>, transform_indices = @transform_2, window_bounds = array<i64: 1, 32>}, {pipeline_mode = #tpu.pipeline_mode<synchronous>, transform_indices = @transform_3, window_bounds = array<i64: 32, 32>}, {pipeline_mode = #tpu.pipeline_mode<synchronous>, transform_indices = @transform_4, window_bounds = array<i64: 1, 32>}, {pipeline_mode = #tpu.pipeline_mode<synchronous>, transform_indices = @transform_5, window_bounds = array<i64: 32, 4>}, {pipeline_mode = #tpu.pipeline_mode<synchronous>, transform_indices = @transform_6, window_bounds = array<i64: 1, 4>}, {transform_indices = @transform_7, window_bounds = array<i64: 8, 4>}]} {
    %c0 = arith.constant 0 : index
    %c0_0 = arith.constant 0 : index
    %0 = vector.load %arg1[%c0, %c0_0] : memref<8x32xf32, #tpu.memory_space<vmem>>, vector<8x32xf32>
    %c0_1 = arith.constant 0 : index
    %c0_2 = arith.constant 0 : index
    %1 = vector.load %arg2[%c0_1, %c0_2] : memref<32x32xf32, #tpu.memory_space<vmem>>, vector<32x32xf32>
    %c0_3 = arith.constant 0 : index
    %c0_4 = arith.constant 0 : index
    %2 = vector.load %arg3[%c0_3, %c0_4] : memref<1x32xf32, #tpu.memory_space<vmem>>, vector<1x32xf32>
    %cst = arith.constant dense<0.000000e+00> : vector<8x32xf32>
    %3 = tpu.matmul %0, %1, %cst {dimension_numbers = #tpu.dot_dimension_numbers<[1], [0], [0], [1], [0, 0, 1, 1], [], []>} : vector<8x32xf32>, vector<32x32xf32>, vector<8x32xf32> -> vector<8x32xf32>
    %4 = vector.broadcast %2 : vector<1x32xf32> to vector<8x32xf32>
    %5 = arith.addf %3, %4 : vector<8x32xf32>
    %cst_5 = arith.constant 0.000000e+00 : f32
    %6 = vector.broadcast %cst_5 : f32 to vector<8x32xf32>
    %7 = arith.maximumf %5, %6 : vector<8x32xf32>
    %c0_6 = arith.constant 0 : index
    %c0_7 = arith.constant 0 : index
    %8 = vector.load %arg4[%c0_6, %c0_7] : memref<32x32xf32, #tpu.memory_space<vmem>>, vector<32x32xf32>
    %c0_8 = arith.constant 0 : index
    %c0_9 = arith.constant 0 : index
    %9 = vector.load %arg5[%c0_8, %c0_9] : memref<1x32xf32, #tpu.memory_space<vmem>>, vector<1x32xf32>
    %cst_10 = arith.constant dense<0.000000e+00> : vector<8x32xf32>
    %10 = tpu.matmul %7, %8, %cst_10 {dimension_numbers = #tpu.dot_dimension_numbers<[1], [0], [0], [1], [0, 0, 1, 1], [], []>} : vector<8x32xf32>, vector<32x32xf32>, vector<8x32xf32> -> vector<8x32xf32>
    %11 = vector.broadcast %9 : vector<1x32xf32> to vector<8x32xf32>
    %12 = arith.addf %10, %11 : vector<8x32xf32>
    %cst_11 = arith.constant 0.000000e+00 : f32
    %13 = vector.broadcast %cst_11 : f32 to vector<8x32xf32>
    %14 = arith.maximumf %12, %13 : vector<8x32xf32>
    %c0_12 = arith.constant 0 : index
    %c0_13 = arith.constant 0 : index
    %15 = vector.load %arg6[%c0_12, %c0_13] : memref<32x4xf32, #tpu.memory_space<vmem>>, vector<32x4xf32>
    %c0_14 = arith.constant 0 : index
    %c0_15 = arith.constant 0 : index
    %16 = vector.load %arg7[%c0_14, %c0_15] : memref<1x4xf32, #tpu.memory_space<vmem>>, vector<1x4xf32>
    %cst_16 = arith.constant dense<0.000000e+00> : vector<8x4xf32>
    %17 = tpu.matmul %14, %15, %cst_16 {dimension_numbers = #tpu.dot_dimension_numbers<[1], [0], [0], [1], [0, 0, 1, 1], [], []>} : vector<8x32xf32>, vector<32x4xf32>, vector<8x4xf32> -> vector<8x4xf32>
    %18 = vector.broadcast %16 : vector<1x4xf32> to vector<8x4xf32>
    %19 = arith.addf %17, %18 : vector<8x4xf32>
    %c0_17 = arith.constant 0 : index
    %c0_18 = arith.constant 0 : index
    %20 = vector.load %arg8[%c0_17, %c0_18] : memref<8x4xf32, #tpu.memory_space<vmem>>, vector<8x4xf32>
    tpu.vector_store %arg8[%c0_17, %c0_18], %19 {strides = array<i32>} : memref<8x4xf32, #tpu.memory_space<vmem>>, vector<8x4xf32>,
    return
  }
  func.func @transform_0(%arg0: i32) -> (i32, i32) {
    %c0_i32 = arith.constant 0 : i32
    %c0_i32_0 = arith.constant 0 : i32
    return %arg0, %c0_i32 : i32, i32
  }
  func.func @transform_1(%arg0: i32) -> (i32, i32) {
    %c0_i32 = arith.constant 0 : i32
    %c0_i32_0 = arith.constant 0 : i32
    %c0_i32_1 = arith.constant 0 : i32
    return %c0_i32, %c0_i32_0 : i32, i32
  }
  func.func @transform_2(%arg0: i32) -> (i32, i32) {
    %c0_i32 = arith.constant 0 : i32
    %c0_i32_0 = arith.constant 0 : i32
    %c0_i32_1 = arith.constant 0 : i32
    return %c0_i32, %c0_i32_0 : i32, i32
  }
  func.func @transform_3(%arg0: i32) -> (i32, i32) {
    %c0_i32 = arith.constant 0 : i32
    %c0_i32_0 = arith.constant 0 : i32
    %c0_i32_1 = arith.constant 0 : i32
    return %c0_i32, %c0_i32_0 : i32, i32
  }
  func.func @transform_4(%arg0: i32) -> (i32, i32) {
    %c0_i32 = arith.constant 0 : i32
    %c0_i32_0 = arith.constant 0 : i32
    %c0_i32_1 = arith.constant 0 : i32
    return %c0_i32, %c0_i32_0 : i32, i32
  }
  func.func @transform_5(%arg0: i32) -> (i32, i32) {
    %c0_i32 = arith.constant 0 : i32
    %c0_i32_0 = arith.constant 0 : i32
    %c0_i32_1 = arith.constant 0 : i32
    return %c0_i32, %c0_i32_0 : i32, i32
  }
  func.func @transform_6(%arg0: i32) -> (i32, i32) {
    %c0_i32 = arith.constant 0 : i32
    %c0_i32_0 = arith.constant 0 : i32
    %c0_i32_1 = arith.constant 0 : i32
    return %c0_i32, %c0_i32_0 : i32, i32
  }
  func.func @transform_7(%arg0: i32) -> (i32, i32) {
    %c0_i32 = arith.constant 0 : i32
    %c0_i32_0 = arith.constant 0 : i32
    return %arg0, %c0_i32 : i32, i32
  }
}

</mosaic_0001>

<llo_original>
// kernel: tpu_custom_call.1
$region0: #{tpu_custom_call.1}
  #allocation0 [shape = 'u32[]', space=smem, size = 0x4, offset = 0x4, fixed_abs, tag = 'smem constant byte address 0x4 - core index']
  #allocation1 [shape = 'u32[144,128]{1,0:T(1,128)}', space=vmem, size = 0x12000, scoped, tag = 'internal scratch']
  %s0 = inlined_call_operand.hbm [shape: f32[16,32], index: 0, kind: input, shape index: {}]
  %s1 = inlined_call_operand.vmem [shape: f32[32,32], index: 1, kind: input, shape index: {}]
  %s2 = inlined_call_operand.vmem [shape: f32[1,32], index: 2, kind: input, shape index: {}]
  %s3 = inlined_call_operand.hbm [shape: f32[32,32], index: 3, kind: input, shape index: {}]
  %s4 = inlined_call_operand.vmem [shape: f32[1,32], index: 4, kind: input, shape index: {}]
  %s5 = inlined_call_operand.vmem [shape: f32[32,4], index: 5, kind: input, shape index: {}]
  %s6 = inlined_call_operand.vmem [shape: f32[1,4], index: 6, kind: input, shape index: {}]
  %s7 = inlined_call_operand.vmem [shape: f32[16,4], index: 7, kind: output, shape index: {}]
  %s8 = sld [smem:[#allocation0]]
  $region69: #{tpu_custom_call.1} parent=0
    _
  %s10 = ssub.s32 1, %s8
  %s11 = scalar_select 0, %s10, %s8
  $region1: #{tpu_custom_call.1} parent=0
    #allocation2 [shape = 'u8[8192]{0}', space=vmem, size = 0x2000, scoped, tag = 'input window, operand 0']
    #allocation3 [shape = 's32[2]{0}', space=sflag, size = 0x8, scoped, tag = 'scoped memory for tpu_custom_call.1']
    #allocation4 [shape = 'u8[16384]{0}', space=vmem, size = 0x4000, scoped, tag = 'input window, operand 3, single buffered']
    #allocation5 [shape = 's32[1]{0}', space=sflag, size = 0x4, scoped, tag = 'scoped memory for tpu_custom_call.1']
    %12 = vsyncpa [#allocation3], 0
    %s13 = scalar_lea.sflag [#allocation3], 1
    %14 = vsyncpa %s13, 0
    %15 = vsyncpa [#allocation5], 0
    loop: start=0, step=1, limit=4
    $region2: #{tpu_custom_call.1} parent=1 // loop_pre_header
      _
    $region3: #{tpu_custom_call.1} parent=1 // loop_header
      %s17 = sphi 0, %s21
      %p18 = scmp.ge.s32.totalorder %s17, 4
      %s27 = sphi 0, %s29
      %s30 = sphi 0, %s27
      %s31 = sphi 0, %s30
      %s47 = sphi 0, %s31
      %s51 = sphi 0, %s51
      %s53 = sphi 0, %s51
      %s54 = sphi 0, %s53
      %s68 = sphi 0, %s54
      %s72 = sphi 0, %s72
      %s74 = sphi 0, %s72
      %s75 = sphi 0, %s74
      %s89 = sphi 0, %s75
      %s93 = sphi 0, %s93
      %s95 = sphi 0, %s93
      %s96 = sphi 0, %s95
      %s110 = sphi 0, %s96
      %s114 = sphi 0, %s114
      %s116 = sphi 0, %s114
      %s117 = sphi 0, %s116
      %s131 = sphi 0, %s117
      %s135 = sphi 0, %s135
      %s137 = sphi 0, %s135
      %s138 = sphi 0, %s137
      %s152 = sphi 0, %s138
      %s156 = sphi 0, %s156
      %s158 = sphi 0, %s156
      %s159 = sphi 0, %s158
      %s173 = sphi 0, %s159
      %s179 = sphi 0, %s181
      %s182 = sphi 0, %s179
      %s183 = sphi 0, %s182
      %s199 = sphi 0, %s183
    $region4: #{tpu_custom_call.1} parent=1 // loop_header_branch
      %20 = sbr.rel (%p18) target = $region8
    $region5: #{tpu_custom_call.1} parent=1 // loop_body
      %s22 = ssub.s32 %s17, 1
      %s23 = ssub.s32 %s17, 2
      %s24 = sadd.s32 %s17, 1
      %s25 = ssub.s32 %s17, %s24
      %p26 = scmp.eq.s32.totalorder %s25, 0
      %s28 = sadd.s32 %s27, 1
      %s29 = scalar_select %p26, %s27, %s28
      %p32 = pneg %p26
      %p33 = scmp.eq.s32.totalorder %s17, 1
      %p34 = por %p32, %p33
      %p35 = scmp.ne.s32.totalorder %s27, %s30
      %p36 = scmp.eq.s32.totalorder %s17, 0
      %p37 = por %p35, %p36
      %p38 = scmp.ne.s32.totalorder %s27, %s30
      %p39 = scmp.eq.s32.totalorder %s22, 1
      %p40 = por %p38, %p39
      %p41 = scmp.ne.s32.totalorder %s30, %s31
      %p42 = scmp.eq.s32.totalorder %s22, 0
      %p43 = por %p41, %p42
      %p44 = scmp.ne.s32.totalorder %s30, %s31
      %p45 = scmp.eq.s32.totalorder %s23, 1
      %p46 = por %p44, %p45
      %p48 = scmp.ne.s32.totalorder %s31, %s47
      %p49 = scmp.eq.s32.totalorder %s23, 0
      %p50 = por %p48, %p49
      %s52 = sadd.s32 %s51, 1
      %p55 = scmp.eq.s32.totalorder %s17, 1
      %p56 = scmp.ne.s32.totalorder %s51, %s53
      %p57 = scmp.eq.s32.totalorder %s17, 0
      %p58 = por %p56, %p57
      %p59 = scmp.ne.s32.totalorder %s51, %s53
      %p60 = scmp.eq.s32.totalorder %s22, 1
      %p61 = por %p59, %p60
      %p62 = scmp.ne.s32.totalorder %s53, %s54
      %p63 = scmp.eq.s32.totalorder %s22, 0
      %p64 = por %p62, %p63
      %p65 = scmp.ne.s32.totalorder %s53, %s54
      %p66 = scmp.eq.s32.totalorder %s23, 1
      %p67 = por %p65, %p66
      %p69 = scmp.ne.s32.totalorder %s54, %s68
      %p70 = scmp.eq.s32.totalorder %s23, 0
      %p71 = por %p69, %p70
      %s73 = sadd.s32 %s72, 1
      %p76 = scmp.eq.s32.totalorder %s17, 1
      %p77 = scmp.ne.s32.totalorder %s72, %s74
      %p78 = scmp.eq.s32.totalorder %s17, 0
      %p79 = por %p77, %p78
      %p80 = scmp.ne.s32.totalorder %s72, %s74
      %p81 = scmp.eq.s32.totalorder %s22, 1
      %p82 = por %p80, %p81
      %p83 = scmp.ne.s32.totalorder %s74, %s75
      %p84 = scmp.eq.s32.totalorder %s22, 0
      %p85 = por %p83, %p84
      %p86 = scmp.ne.s32.totalorder %s74, %s75
      %p87 = scmp.eq.s32.totalorder %s23, 1
      %p88 = por %p86, %p87
      %p90 = scmp.ne.s32.totalorder %s75, %s89
      %p91 = scmp.eq.s32.totalorder %s23, 0
      %p92 = por %p90, %p91
      %s94 = sadd.s32 %s93, 1
      %p97 = scmp.eq.s32.totalorder %s17, 1
      %p98 = scmp.ne.s32.totalorder %s93, %s95
      %p99 = scmp.eq.s32.totalorder %s17, 0
      %p100 = por %p98, %p99
      %p101 = scmp.ne.s32.totalorder %s93, %s95
      %p102 = scmp.eq.s32.totalorder %s22, 1
      %p103 = por %p101, %p102
      %p104 = scmp.ne.s32.totalorder %s95, %s96
      %p105 = scmp.eq.s32.totalorder %s22, 0
      %p106 = por %p104, %p105
      %p107 = scmp.ne.s32.totalorder %s95, %s96
      %p108 = scmp.eq.s32.totalorder %s23, 1
      %p109 = por %p107, %p108
      %p111 = scmp.ne.s32.totalorder %s96, %s110
      %p112 = scmp.eq.s32.totalorder %s23, 0
      %p113 = por %p111, %p112
      %s115 = sadd.s32 %s114, 1
      %p118 = scmp.eq.s32.totalorder %s17, 1
      %p119 = scmp.ne.s32.totalorder %s114, %s116
      %p120 = scmp.eq.s32.totalorder %s17, 0
      %p121 = por %p119, %p120
      %p122 = scmp.ne.s32.totalorder %s114, %s116
      %p123 = scmp.eq.s32.totalorder %s22, 1
      %p124 = por %p122, %p123
      %p125 = scmp.ne.s32.totalorder %s116, %s117
      %p126 = scmp.eq.s32.totalorder %s22, 0
      %p127 = por %p125, %p126
      %p128 = scmp.ne.s32.totalorder %s116, %s117
      %p129 = scmp.eq.s32.totalorder %s23, 1
      %p130 = por %p128, %p129
      %p132 = scmp.ne.s32.totalorder %s117, %s131
      %p133 = scmp.eq.s32.totalorder %s23, 0
      %p134 = por %p132, %p133
      %s136 = sadd.s32 %s135, 1
      %p139 = scmp.eq.s32.totalorder %s17, 1
      %p140 = scmp.ne.s32.totalorder %s135, %s137
      %p141 = scmp.eq.s32.totalorder %s17, 0
      %p142 = por %p140, %p141
      %p143 = scmp.ne.s32.totalorder %s135, %s137
      %p144 = scmp.eq.s32.totalorder %s22, 1
      %p145 = por %p143, %p144
      %p146 = scmp.ne.s32.totalorder %s137, %s138
      %p147 = scmp.eq.s32.totalorder %s22, 0
      %p148 = por %p146, %p147
      %p149 = scmp.ne.s32.totalorder %s137, %s138
      %p150 = scmp.eq.s32.totalorder %s23, 1
      %p151 = por %p149, %p150
      %p153 = scmp.ne.s32.totalorder %s138, %s152
      %p154 = scmp.eq.s32.totalorder %s23, 0
      %p155 = por %p153, %p154
      %s157 = sadd.s32 %s156, 1
      %p160 = scmp.eq.s32.totalorder %s17, 1
      %p161 = scmp.ne.s32.totalorder %s156, %s158
      %p162 = scmp.eq.s32.totalorder %s17, 0
      %p163 = por %p161, %p162
      %p164 = scmp.ne.s32.totalorder %s156, %s158
      %p165 = scmp.eq.s32.totalorder %s22, 1
      %p166 = por %p164, %p165
      %p167 = scmp.ne.s32.totalorder %s158, %s159
      %p168 = scmp.eq.s32.totalorder %s22, 0
      %p169 = por %p167, %p168
      %p170 = scmp.ne.s32.totalorder %s158, %s159
      %p171 = scmp.eq.s32.totalorder %s23, 1
      %p172 = por %p170, %p171
      %p174 = scmp.ne.s32.totalorder %s159, %s173
      %p175 = scmp.eq.s32.totalorder %s23, 0
      %p176 = por %p174, %p175
      %s177 = ssub.s32 %s17, %s24
      %p178 = scmp.eq.s32.totalorder %s177, 0
      %s180 = sadd.s32 %s179, 1
      %s181 = scalar_select %p178, %s179, %s180
      %p184 = pneg %p178
      %p185 = scmp.eq.s32.totalorder %s17, 1
      %p186 = por %p184, %p185
      %p187 = scmp.ne.s32.totalorder %s179, %s182
      %p188 = scmp.eq.s32.totalorder %s17, 0
      %p189 = por %p187, %p188
      %p190 = scmp.ne.s32.totalorder %s179, %s182
      %p191 = scmp.eq.s32.totalorder %s22, 1
      %p192 = por %p190, %p191
      %p193 = scmp.ne.s32.totalorder %s182, %s183
      %p194 = scmp.eq.s32.totalorder %s22, 0
      %p195 = por %p193, %p194
      %p196 = scmp.ne.s32.totalorder %s182, %s183
      %p197 = scmp.eq.s32.totalorder %s23, 1
      %p198 = por %p196, %p197
      %p200 = scmp.ne.s32.totalorder %s183, %s199
      %p201 = scmp.eq.s32.totalorder %s23, 0
      %p202 = por %p200, %p201
      %p203 = scmp.le.s32.totalorder 1, %s17
      %p204 = scmp.lt.s32.totalorder %s17, 3
      %p205 = pnand %p203, %p204
      %p206 = pneg %p205
      // Predicated region
      $region9: #{tpu_custom_call.1} parent=5 // pred_check
        _
      $region10: #{tpu_custom_call.1} parent=5 // pred_check_branch
        %208 = sbr.rel (%p205) target = $region12
      $region11: #{tpu_custom_call.1} parent=5 // pred_region
        %s209 = ssub.s32 %s17, 1
        // Predicated region
        $region13: #{tpu_custom_call.1} parent=11 // pred_check
          %p210 = pneg %p64
        $region14: #{tpu_custom_call.1} parent=11 // pred_check_branch
          %212 = sbr.rel (%p210) target = $region16
        $region15: #{tpu_custom_call.1} parent=11 // pred_region
          _
        $region16: #{tpu_custom_call.1} parent=11 // pred_fallthru
          _
        // Predicated region
        $region17: #{tpu_custom_call.1} parent=11 // pred_check
          %p213 = pneg %p85
        $region18: #{tpu_custom_call.1} parent=11 // pred_check_branch
          %215 = sbr.rel (%p213) target = $region20
        $region19: #{tpu_custom_call.1} parent=11 // pred_region
          _
        $region20: #{tpu_custom_call.1} parent=11 // pred_fallthru
          _
        // Predicated region
        $region21: #{tpu_custom_call.1} parent=11 // pred_check
          %p216 = pneg %p106
        $region22: #{tpu_custom_call.1} parent=11 // pred_check_branch
          %218 = sbr.rel (%p216) target = $region24
        $region23: #{tpu_custom_call.1} parent=11 // pred_region
          %s220 = ssub.s32 512, 512
          %221 = vsyncadd [#allocation5], %s220
          %s222 = sshll.u32 [#allocation4], 4
          %s223 = int_to_ptr.vmem [resolvable:$true] %s222
          %228 = dma.hbm_to_vmem [thread:$0]  %s3, 512, %s223, [#allocation5], 128, 128, 8
        $region24: #{tpu_custom_call.1} parent=11 // pred_fallthru
          _
        // Predicated region
        $region25: #{tpu_custom_call.1} parent=11 // pred_check
          %p229 = pneg %p127
        $region26: #{tpu_custom_call.1} parent=11 // pred_check_branch
          %231 = sbr.rel (%p229) target = $region28
        $region27: #{tpu_custom_call.1} parent=11 // pred_region
          _
        $region28: #{tpu_custom_call.1} parent=11 // pred_fallthru
          _
        // Predicated region
        $region29: #{tpu_custom_call.1} parent=11 // pred_check
          %p232 = pneg %p148
        $region30: #{tpu_custom_call.1} parent=11 // pred_check_branch
          %234 = sbr.rel (%p232) target = $region32
        $region31: #{tpu_custom_call.1} parent=11 // pred_region
          _
        $region32: #{tpu_custom_call.1} parent=11 // pred_fallthru
          _
        // Predicated region
        $region33: #{tpu_custom_call.1} parent=11 // pred_check
          %p235 = pneg %p169
        $region34: #{tpu_custom_call.1} parent=11 // pred_check_branch
          %237 = sbr.rel (%p235) target = $region36
        $region35: #{tpu_custom_call.1} parent=11 // pred_region
          _
        $region36: #{tpu_custom_call.1} parent=11 // pred_fallthru
          _
      $region12: #{tpu_custom_call.1} parent=5 // pred_fallthru
        _
      %p238 = scmp.lt.s32.totalorder %s17, 2
      // Predicated region
      $region37: #{tpu_custom_call.1} parent=5 // pred_check
        %p239 = pneg %p238
      $region38: #{tpu_custom_call.1} parent=5 // pred_check_branch
        %241 = sbr.rel (%p239) target = $region40
      $region39: #{tpu_custom_call.1} parent=5 // pred_region
        // Predicated region
        $region41: #{tpu_custom_call.1} parent=39 // pred_check
          %p242 = pneg %p37
        $region42: #{tpu_custom_call.1} parent=39 // pred_check_branch
          %244 = sbr.rel (%p242) target = $region44
        $region43: #{tpu_custom_call.1} parent=39 // pred_region
          %s245 = sand.u32 %s27, 1
          %s246 = scalar_lea.sflag [#allocation3], %s245
          %s247 = sand.u32 %s27, 1
          %s248 = smul.addr %s247, 8
          %s249 = scalar_lea.vmem [#allocation2], %s248
          %s251 = ssub.s32 128, 128
          %252 = vsyncadd %s246, %s251
          %s253 = smul.addr %s17, 128
          %s254 = scalar_lea.hbm %s0, %s253
          %s256 = sshll.u32 %s249, 4
          %s257 = int_to_ptr.vmem [resolvable:$true] %s256
          %259 = dma.hbm_to_vmem [thread:$0]  %s254, 128, %s257, %s246
        $region44: #{tpu_custom_call.1} parent=39 // pred_fallthru
          _
      $region40: #{tpu_custom_call.1} parent=5 // pred_fallthru
        _
      %p260 = scmp.le.s32.totalorder 1, %s17
      %p261 = scmp.lt.s32.totalorder %s17, 3
      %p262 = pnand %p260, %p261
      %p263 = pneg %p262
      // Predicated region
      $region45: #{tpu_custom_call.1} parent=5 // pred_check
        _
      $region46: #{tpu_custom_call.1} parent=5 // pred_check_branch
        %265 = sbr.rel (%p262) target = $region48
      $region47: #{tpu_custom_call.1} parent=5 // pred_region
        %s266 = ssub.s32 %s17, 1
        %s267 = sand.u32 %s30, 1
        %s268 = scalar_lea.sflag [#allocation3], %s267
        %s269 = sand.u32 %s30, 1
        %s270 = smul.addr %s269, 8
        %s271 = scalar_lea.vmem [#allocation2], %s270
        // Predicated region
        $region49: #{tpu_custom_call.1} parent=47 // pred_check
          %p272 = pneg %p43
        $region50: #{tpu_custom_call.1} parent=47 // pred_check_branch
          %274 = sbr.rel (%p272) target = $region52
        $region51: #{tpu_custom_call.1} parent=47 // pred_region
          %275 = dma.done %s268, 128
        $region52: #{tpu_custom_call.1} parent=47 // pred_fallthru
          _
        // Predicated region
        $region53: #{tpu_custom_call.1} parent=47 // pred_check
          %p276 = pneg %p106
        $region54: #{tpu_custom_call.1} parent=47 // pred_check_branch
          %278 = sbr.rel (%p276) target = $region56
        $region55: #{tpu_custom_call.1} parent=47 // pred_region
          %279 = dma.done [#allocation5], 512
        $region56: #{tpu_custom_call.1} parent=47 // pred_fallthru
          _
        %s280 = sand.u32 %s30, 1
        %s281 = scalar_lea.sflag [#allocation3], %s280
        %s282 = sand.u32 %s30, 1
        %s283 = smul.addr %s282, 8
        %s284 = scalar_lea.vmem [#allocation2], %s283
        %p285 = pneg %p43
        %p286 = pneg %p40
        %p287 = pneg %p64
        %p288 = pneg %p61
        %p289 = pneg %p85
        %p290 = pneg %p82
        %p291 = pneg %p106
        %p292 = pneg %p103
        %p293 = pneg %p127
        %p294 = pneg %p124
        %p295 = pneg %p148
        %p296 = pneg %p145
        %p297 = pneg %p169
        %p298 = pneg %p166
        %p299 = pneg %p195
        %p300 = pneg %p192
        %p301 = scmp.lt.s32.totalorder %s22, 1
        %s302 = scalar_select %p301, %s22, 1
        %s303 = smul.addr %s302, 8
        %s304 = scalar_lea.vmem %s7, %s303
        %p305 = scmp.lt.s32.totalorder %s22, 1
        %s306 = scalar_select %p305, %s22, 1
        %s307 = smul.addr %s306, 8
        %s308 = scalar_lea.vmem %s7, %s307
        %v309 = vld [vmem:[%s271] sm:$0xff]
        %v310 = vld [vmem:[%s1] sm:$0xff]
        %v311 = vld [vmem:[%s1 + $0x8] sm:$0xff]
        %v312 = vld [vmem:[%s1 + $0x10] sm:$0xff]
        %v313 = vld [vmem:[%s1 + $0x18] sm:$0xff]
        %v314 = vld [vmem:[%s2] sm:$0x1]
        %v316 = vlaneseq
        %v317 = vshrl.u32 %v316, 7
        %v318 = vsub.s32 0, %v317
        %v319 = vrot.slane %v314, %v318
        %vm321 = vcmask 261120
        %v323 = vsel %vm321, %v309, 0
        %325 = vmatprep.subr.mxu0 0.0
        %326 = vmatpush1.msra.mxu0 %v310
        %327 = vmatprep.subr.mxu0 0.0
        %328 = vmatpush1.msra.mxu0 %v311
        %329 = vmatprep.subr.mxu0 0.0
        %330 = vmatpush1.msra.mxu0 %v312
        %331 = vmatprep.subr.mxu0 0.0
        %332 = vmatpush1.msra.mxu0 %v313
        %333 = vmatprep.subr.mxu0 0.0
        %334 = vmatpush1.msra.mxu0 0.0
        %335 = vmatprep.subr.mxu0 0.0
        %336 = vmatpush1.msra.mxu0 0.0
        %337 = vmatprep.subr.mxu0 0.0
        %338 = vmatpush1.msra.mxu0 0.0
        %339 = vmatprep.subr.mxu0 0.0
        %340 = vmatpush1.msra.mxu0 0.0
        %341 = vmatprep.subr.mxu0 0.0
        %342 = vmatpush1.msra.mxu0 0.0
        %343 = vmatprep.subr.mxu0 0.0
        %344 = vmatpush1.msra.mxu0 0.0
        %345 = vmatprep.subr.mxu0 0.0
        %346 = vmatpush1.msra.mxu0 0.0
        %347 = vmatprep.subr.mxu0 0.0
        %348 = vmatpush1.msra.mxu0 0.0
        %349 = vmatprep.subr.mxu0 0.0
        %350 = vmatpush1.msra.mxu0 0.0
        %351 = vmatprep.subr.mxu0 0.0
        %352 = vmatpush1.msra.mxu0 0.0
        %353 = vmatprep.subr.mxu0 0.0
        %354 = vmatpush1.msra.mxu0 0.0
        %355 = vmatprep.subr.mxu0 0.0
        %356 = vmatpush1.msra.mxu0 0.0
        %357 = vmatprep.subr.mxu0 0.0
        %358 = vmatpush1.msra.mxu0 0.0
        %359 = vmatprep.subr.mxu0 0.0
        %360 = vmatpush1.msra.mxu0 0.0
        %361 = vmatprep.subr.mxu0 0.0
        %362 = vmatpush1.msra.mxu0 0.0
        %363 = vmatprep.subr.mxu0 0.0
        %364 = vmatpush1.msra.mxu0 0.0
        %365 = vmatprep.subr.mxu0 0.0
        %366 = vmatpush1.msra.mxu0 0.0
        %367 = vmatprep.subr.mxu0 0.0
        %368 = vmatpush1.msra.mxu0 0.0
        %369 = vmatprep.subr.mxu0 0.0
        %370 = vmatpush1.msra.mxu0 0.0
        %371 = vmatprep.subr.mxu0 0.0
        %372 = vmatpush1.msra.mxu0 0.0
        %373 = vmatprep.subr.mxu0 0.0
        %374 = vmatpush1.msra.mxu0 0.0
        %375 = vmatprep.subr.mxu0 0.0
        %376 = vmatpush1.msra.mxu0 0.0
        %377 = vmatprep.subr.mxu0 0.0
        %378 = vmatpush1.msra.mxu0 0.0
        %379 = vmatprep.subr.mxu0 0.0
        %380 = vmatpush1.msra.mxu0 0.0
        %381 = vmatprep.subr.mxu0 0.0
        %382 = vmatpush1.msra.mxu0 0.0
        %383 = vmatprep.subr.mxu0 0.0
        %384 = vmatpush1.msra.mxu0 0.0
        %385 = vmatprep.subr.mxu0 0.0
        %386 = vmatpush1.msra.mxu0 0.0
        %387 = vmatprep.subr.mxu0 0.0
        %388 = vmatpush1.msra.mxu0 0.0
        %389 = vmatprep.mubr.f32.mxu0 0.0
        %390 = vmatmul.mubr.f32.gmra.mrb[0].mxu0 %v323
        %v391 = vpop.f32.mrb[0].mxu0
        %v392 = vadd.f32 %v319, %v391
        %v393 = vpop.f32.mrb[0].mxu0
        %394 = vdwg.mxu0
        %v395 = vmax.f32 %v392, 0.0
        %v396 = vld [vmem:[#allocation4] sm:$0xff]
        %v397 = vld [vmem:[#allocation4 + $0x8] sm:$0xff]
        %v398 = vld [vmem:[#allocation4 + $0x10] sm:$0xff]
        %v399 = vld [vmem:[#allocation4 + $0x18] sm:$0xff]
        %v400 = vld [vmem:[%s4] sm:$0x1]
        %v402 = vlaneseq
        %v403 = vshrl.u32 %v402, 7
        %v404 = vsub.s32 0, %v403
        %v405 = vrot.slane %v400, %v404
        %v408 = vsel %vm321, %v395, 0
        %410 = vmatprep.subr.mxu0 0.0
        %411 = vmatpush1.msra.mxu0 %v396
        %412 = vmatprep.subr.mxu0 0.0
        %413 = vmatpush1.msra.mxu0 %v397
        %414 = vmatprep.subr.mxu0 0.0
        %415 = vmatpush1.msra.mxu0 %v398
        %416 = vmatprep.subr.mxu0 0.0
        %417 = vmatpush1.msra.mxu0 %v399
        %418 = vmatprep.subr.mxu0 0.0
        %419 = vmatpush1.msra.mxu0 0.0
        %420 = vmatprep.subr.mxu0 0.0
        %421 = vmatpush1.msra.mxu0 0.0
        %422 = vmatprep.subr.mxu0 0.0
        %423 = vmatpush1.msra.mxu0 0.0
        %424 = vmatprep.subr.mxu0 0.0
        %425 = vmatpush1.msra.mxu0 0.0
        %426 = vmatprep.subr.mxu0 0.0
        %427 = vmatpush1.msra.mxu0 0.0
        %428 = vmatprep.subr.mxu0 0.0
        %429 = vmatpush1.msra.mxu0 0.0
        %430 = vmatprep.subr.mxu0 0.0
        %431 = vmatpush1.msra.mxu0 0.0
        %432 = vmatprep.subr.mxu0 0.0
        %433 = vmatpush1.msra.mxu0 0.0
        %434 = vmatprep.subr.mxu0 0.0
        %435 = vmatpush1.msra.mxu0 0.0
        %436 = vmatprep.subr.mxu0 0.0
        %437 = vmatpush1.msra.mxu0 0.0
        %438 = vmatprep.subr.mxu0 0.0
        %439 = vmatpush1.msra.mxu0 0.0
        %440 = vmatprep.subr.mxu0 0.0
        %441 = vmatpush1.msra.mxu0 0.0
        %442 = vmatprep.subr.mxu0 0.0
        %443 = vmatpush1.msra.mxu0 0.0
        %444 = vmatprep.subr.mxu0 0.0
        %445 = vmatpush1.msra.mxu0 0.0
        %446 = vmatprep.subr.mxu0 0.0
        %447 = vmatpush1.msra.mxu0 0.0
        %448 = vmatprep.subr.mxu0 0.0
        %449 = vmatpush1.msra.mxu0 0.0
        %450 = vmatprep.subr.mxu0 0.0
        %451 = vmatpush1.msra.mxu0 0.0
        %452 = vmatprep.subr.mxu0 0.0
        %453 = vmatpush1.msra.mxu0 0.0
        %454 = vmatprep.subr.mxu0 0.0
        %455 = vmatpush1.msra.mxu0 0.0
        %456 = vmatprep.subr.mxu0 0.0
        %457 = vmatpush1.msra.mxu0 0.0
        %458 = vmatprep.subr.mxu0 0.0
        %459 = vmatpush1.msra.mxu0 0.0
        %460 = vmatprep.subr.mxu0 0.0
        %461 = vmatpush1.msra.mxu0 0.0
        %462 = vmatprep.subr.mxu0 0.0
        %463 = vmatpush1.msra.mxu0 0.0
        %464 = vmatprep.subr.mxu0 0.0
        %465 = vmatpush1.msra.mxu0 0.0
        %466 = vmatprep.subr.mxu0 0.0
        %467 = vmatpush1.msra.mxu0 0.0
        %468 = vmatprep.subr.mxu0 0.0
        %469 = vmatpush1.msra.mxu0 0.0
        %470 = vmatprep.subr.mxu0 0.0
        %471 = vmatpush1.msra.mxu0 0.0
        %472 = vmatprep.subr.mxu0 0.0
        %473 = vmatpush1.msra.mxu0 0.0
        %474 = vmatprep.mubr.f32.mxu0 0.0
        %475 = vmatmul.mubr.f32.gmra.mrb[0].mxu0 %v408
        %v476 = vpop.f32.mrb[0].mxu0
        %v477 = vadd.f32 %v405, %v476
        %v478 = vpop.f32.mrb[0].mxu0
        %479 = vdwg.mxu0
        %v480 = vmax.f32 %v477, 0.0
        %v481 = vld [vmem:[%s5] sm:$0xff]
        %v482 = vld [vmem:[%s5 + $0x8] sm:$0xff]
        %v483 = vld [vmem:[%s5 + $0x10] sm:$0xff]
        %v484 = vld [vmem:[%s5 + $0x18] sm:$0xff]
        %v485 = vld [vmem:[%s6] sm:$0x1]
        %v487 = vlaneseq
        %v488 = vshrl.u32 %v487, 7
        %v489 = vsub.s32 0, %v488
        %v490 = vrot.slane %v485, %v489
        %v493 = vsel %vm321, %v480, 0
        %495 = vmatprep.subr.mxu0 0.0
        %496 = vmatpush1.msra.mxu0 %v481
        %497 = vmatprep.subr.mxu0 0.0
        %498 = vmatpush1.msra.mxu0 %v482
        %499 = vmatprep.subr.mxu0 0.0
        %500 = vmatpush1.msra.mxu0 %v483
        %501 = vmatprep.subr.mxu0 0.0
        %502 = vmatpush1.msra.mxu0 %v484
        %503 = vmatprep.subr.mxu0 0.0
        %504 = vmatpush1.msra.mxu0 0.0
        %505 = vmatprep.subr.mxu0 0.0
        %506 = vmatpush1.msra.mxu0 0.0
        %507 = vmatprep.subr.mxu0 0.0
        %508 = vmatpush1.msra.mxu0 0.0
        %509 = vmatprep.subr.mxu0 0.0
        %510 = vmatpush1.msra.mxu0 0.0
        %511 = vmatprep.subr.mxu0 0.0
        %512 = vmatpush1.msra.mxu0 0.0
        %513 = vmatprep.subr.mxu0 0.0
        %514 = vmatpush1.msra.mxu0 0.0
        %515 = vmatprep.subr.mxu0 0.0
        %516 = vmatpush1.msra.mxu0 0.0
        %517 = vmatprep.subr.mxu0 0.0
        %518 = vmatpush1.msra.mxu0 0.0
        %519 = vmatprep.subr.mxu0 0.0
        %520 = vmatpush1.msra.mxu0 0.0
        %521 = vmatprep.subr.mxu0 0.0
        %522 = vmatpush1.msra.mxu0 0.0
        %523 = vmatprep.subr.mxu0 0.0
        %524 = vmatpush1.msra.mxu0 0.0
        %525 = vmatprep.subr.mxu0 0.0
        %526 = vmatpush1.msra.mxu0 0.0
        %527 = vmatprep.subr.mxu0 0.0
        %528 = vmatpush1.msra.mxu0 0.0
        %529 = vmatprep.subr.mxu0 0.0
        %530 = vmatpush1.msra.mxu0 0.0
        %531 = vmatprep.subr.mxu0 0.0
        %532 = vmatpush1.msra.mxu0 0.0
        %533 = vmatprep.subr.mxu0 0.0
        %534 = vmatpush1.msra.mxu0 0.0
        %535 = vmatprep.subr.mxu0 0.0
        %536 = vmatpush1.msra.mxu0 0.0
        %537 = vmatprep.subr.mxu0 0.0
        %538 = vmatpush1.msra.mxu0 0.0
        %539 = vmatprep.subr.mxu0 0.0
        %540 = vmatpush1.msra.mxu0 0.0
        %541 = vmatprep.subr.mxu0 0.0
        %542 = vmatpush1.msra.mxu0 0.0
        %543 = vmatprep.subr.mxu0 0.0
        %544 = vmatpush1.msra.mxu0 0.0
        %545 = vmatprep.subr.mxu0 0.0
        %546 = vmatpush1.msra.mxu0 0.0
        %547 = vmatprep.subr.mxu0 0.0
        %548 = vmatpush1.msra.mxu0 0.0
        %549 = vmatprep.subr.mxu0 0.0
        %550 = vmatpush1.msra.mxu0 0.0
        %551 = vmatprep.subr.mxu0 0.0
        %552 = vmatpush1.msra.mxu0 0.0
        %553 = vmatprep.subr.mxu0 0.0
        %554 = vmatpush1.msra.mxu0 0.0
        %555 = vmatprep.subr.mxu0 0.0
        %556 = vmatpush1.msra.mxu0 0.0
        %557 = vmatprep.subr.mxu0 0.0
        %558 = vmatpush1.msra.mxu0 0.0
        %559 = vmatprep.mubr.f32.mxu0 0.0
        %560 = vmatmul.mubr.f32.gmra.mrb[0].mxu0 %v493
        %v561 = vpop.f32.mrb[0].mxu0
        %v562 = vadd.f32 %v490, %v561
        %v563 = vpop.f32.mrb[0].mxu0
        %564 = vdwg.mxu0
        %vm565 = vcmask 31744
        %566 = vst.msk [vmem:[%s308] sm:$0xff] %vm565, %v562
        %p567 = scmp.lt.s32.totalorder %s22, 1
        %s568 = scalar_select %p567, %s22, 1
        %s569 = smul.addr %s568, 8
        %s570 = scalar_lea.vmem %s7, %s569
        // Predicated region
        $region57: #{tpu_custom_call.1} parent=47 // pred_check
          %p571 = pneg %p192
        $region58: #{tpu_custom_call.1} parent=47 // pred_check_branch
          %573 = sbr.rel (%p571) target = $region60
        $region59: #{tpu_custom_call.1} parent=47 // pred_region
          _
        $region60: #{tpu_custom_call.1} parent=47 // pred_fallthru
          _
      $region48: #{tpu_custom_call.1} parent=5 // pred_fallthru
        _
      %p574 = scmp.le.s32.totalorder 2, %s17
      // Predicated region
      $region61: #{tpu_custom_call.1} parent=5 // pred_check
        %p575 = pneg %p574
      $region62: #{tpu_custom_call.1} parent=5 // pred_check_branch
        %577 = sbr.rel (%p575) target = $region64
      $region63: #{tpu_custom_call.1} parent=5 // pred_region
        %s578 = ssub.s32 %s17, 2
        // Predicated region
        $region65: #{tpu_custom_call.1} parent=63 // pred_check
          %p579 = pneg %p198
        $region66: #{tpu_custom_call.1} parent=63 // pred_check_branch
          %581 = sbr.rel (%p579) target = $region68
        $region67: #{tpu_custom_call.1} parent=63 // pred_region
          %p582 = scmp.lt.s32.totalorder %s23, 1
          %s583 = scalar_select %p582, %s23, 1
          %s584 = smul.addr %s583, 8
          %s585 = scalar_lea.vmem %s7, %s584
        $region68: #{tpu_custom_call.1} parent=63 // pred_fallthru
          _
      $region64: #{tpu_custom_call.1} parent=5 // pred_fallthru
        _
    $region6: #{tpu_custom_call.1} parent=1 // loop_footer
      %s21 = sadd.s32 1, %s17
    $region7: #{tpu_custom_call.1} parent=1 // loop_footer_branch
      %16 = sbr.rel target = $region3
    $region8: #{tpu_custom_call.1} parent=1 // loop_exit
      _
    %586 = vsyncpa [#allocation3], 1
    %s587 = scalar_lea.sflag [#allocation3], 1
    %588 = vsyncpa %s587, 1
    %589 = vsyncpa [#allocation5], 1

</llo_original>
